<compile_context>
chip_gen: v7x
topology: tpu7x:2x2x1
jax: 0.10.0
libtpu: 0.0.40
codegen_flags: <defaults>
</compile_context>

<pallas_src>
import functools

import jax
import jax.numpy as jnp
from jax.experimental import pallas as pl
from jax.experimental.pallas import tpu as pltpu


def _pair_softmax_kernel(x_ref, o_ref, *, hw):
    # x_ref / o_ref: (TM, 2*hw). Lanes [0, hw) = channel 2i ("a"),
    # lanes [hw, 2*hw) = channel 2i+1 ("b").
    x = x_ref[...]
    z = (x[:, :hw] - x[:, hw:]).astype(jnp.float32)
    # 2-way softmax == sigmoid of the difference (exact, numerically stable:
    # exp(-|z|) overflow saturates to 0/1, never NaN). No XLU reduce, no
    # per-pair max/sum, single exp on the EUP.
    p0 = 1.0 / (1.0 + jnp.exp(-z))
    o_ref[:, :hw] = p0.astype(o_ref.dtype)
    o_ref[:, hw:] = (1.0 - p0).astype(o_ref.dtype)


def _choose_row_tile(m, row_bytes):
    """Row-tile TM: ~2 MiB tiles to amortize ~0.35us/step grid overhead,
    multiple of 8 for dense sublanes, or the full row count (always legal).
    Double-buffered in+out at 2 MiB stays well under v7x's 32 MiB scoped VMEM."""
    target_bytes = 2 * 1024 * 1024
    tm = (target_bytes // max(row_bytes, 1)) // 8 * 8
    tm = max(tm, 8)
    if tm >= m:
        # Whole array fits one tile; if big enough keep >= 2 balanced grid
        # steps so both v7x TensorCores get work (no effect on v5e/v6e).
        if m >= 16 and (m // 2) % 8 == 0:
            return m // 2
        return m
    return tm


def pairwise_softmax(x, cls_num):
    """Pallas replica of the PyTorch `softmax(cls_num)` module forward.

    For each i in range(cls_num): softmax over channel pair [2i, 2i+2).
    Channels >= 2*cls_num stay zero (torch.zeros_like semantics).
    """
    N, C, H, W = x.shape
    used_c = 2 * cls_num
    assert used_c <= C, "cls_num too large for channel dim"
    if cls_num == 0:
        return jnp.zeros_like(x)

    HW = H * W
    M = N * cls_num

    # Free (contiguous) reshapes only — no extra HBM passes on the hot path.
    x_used = x if used_c == C else x[:, :used_c]
    x2 = x_used.reshape(M, 2 * HW)

    tm = _choose_row_tile(M, 2 * HW * x.dtype.itemsize)
    grid = (pl.cdiv(M, tm),)

    out = pl.pallas_call(
        functools.partial(_pair_softmax_kernel, hw=HW),
        out_shape=jax.ShapeDtypeStruct((M, 2 * HW), x.dtype),
        grid=grid,
        in_specs=[pl.BlockSpec((tm, 2 * HW), lambda i: (i, 0))],
        out_specs=pl.BlockSpec((tm, 2 * HW), lambda i: (i, 0)),
        compiler_params=pltpu.CompilerParams(
            dimension_semantics=("parallel",)),
    )(x2)

    y_used = out.reshape(N, used_c, H, W)
    if used_c < C:
        # Only materializes when C > 2*cls_num (zero extra HBM passes for the
        # common C == 2*cls_num case, which is what the test exercises).
        pad = jnp.zeros((N, C - used_c, H, W), dtype=x.dtype)
        y = jnp.concatenate([y_used, pad], axis=1)
    else:
        y = y_used
    return y


def _reference(x, cls_num):
    # Pure-JAX reference of the PyTorch module.
    y = jnp.zeros_like(x)
    for i in range(cls_num):
        sl = jax.nn.softmax(x[:, i * 2:i * 2 + 2], axis=1)
        y = y.at[:, i * 2:i * 2 + 2].set(sl)
    return y


if __name__ == "__main__":
    key = jax.random.PRNGKey(0)
    N, cls_num, H, W = 2, 2, 16, 16
    C = 2 * cls_num
    x = jax.random.normal(key, (N, C, H, W), dtype=jnp.float32)

    y = jax.block_until_ready(pairwise_softmax(x, cls_num))
    y_ref = _reference(x, cls_num)

    assert y.shape == x.shape and y.dtype == x.dtype
    assert jnp.allclose(y, y_ref, atol=1e-6, rtol=1e-5), float(
        jnp.max(jnp.abs(y - y_ref)))

    print("KERNEL_OK")
</pallas_src>

<mosaic_0001>
module attributes {stable_mosaic.version = 11 : i64} {
  func.func @_pair_softmax_kernel(%arg0: i32, %arg1: memref<4x512xf32, #tpu.memory_space<vmem>>, %arg2: memref<4x512xf32, #tpu.memory_space<vmem>>) attributes {dimension_semantics = [#tpu.dimension_semantics<parallel>], iteration_bounds = array<i64: 1>, scalar_prefetch = 0 : i64, scratch_operands = 0 : i64, tpu.core_type = #tpu.core_type<tc>, window_params = [{transform_indices = @transform_0, window_bounds = array<i64: 4, 512>}, {transform_indices = @transform_1, window_bounds = array<i64: 4, 512>}]} {
    %c0 = arith.constant 0 : index
    %c0_0 = arith.constant 0 : index
    %0 = vector.load %arg1[%c0, %c0_0] : memref<4x512xf32, #tpu.memory_space<vmem>>, vector<4x512xf32>
    %1 = vector.extract_strided_slice %0 {offsets = [0, 0], sizes = [4, 256], strides = [1, 1]} : vector<4x512xf32> to vector<4x256xf32>
    %2 = vector.extract_strided_slice %0 {offsets = [0, 256], sizes = [4, 256], strides = [1, 1]} : vector<4x512xf32> to vector<4x256xf32>
    %3 = arith.subf %1, %2 : vector<4x256xf32>
    %cst = arith.constant 0.000000e+00 : f32
    %4 = vector.broadcast %cst : f32 to vector<4x256xf32>
    %5 = arith.subf %4, %3 : vector<4x256xf32>
    %6 = math.exp %5 : vector<4x256xf32>
    %cst_1 = arith.constant 1.000000e+00 : f32
    %7 = vector.broadcast %cst_1 : f32 to vector<4x256xf32>
    %8 = arith.addf %7, %6 : vector<4x256xf32>
    %cst_2 = arith.constant 1.000000e+00 : f32
    %9 = vector.broadcast %cst_2 : f32 to vector<4x256xf32>
    %10 = arith.divf %9, %8 : vector<4x256xf32>
    %c0_3 = arith.constant 0 : index
    %c0_4 = arith.constant 0 : index
    %11 = vector.load %arg2[%c0_3, %c0_4] : memref<4x512xf32, #tpu.memory_space<vmem>>, vector<4x256xf32>
    tpu.vector_store %arg2[%c0_3, %c0_4], %10 {strides = array<i32>} : memref<4x512xf32, #tpu.memory_space<vmem>>, vector<4x256xf32>,
    %cst_5 = arith.constant 1.000000e+00 : f32
    %12 = vector.broadcast %cst_5 : f32 to vector<4x256xf32>
    %13 = arith.subf %12, %10 : vector<4x256xf32>
    %c0_6 = arith.constant 0 : index
    %c256 = arith.constant 256 : index
    %14 = vector.load %arg2[%c0_6, %c256] : memref<4x512xf32, #tpu.memory_space<vmem>>, vector<4x256xf32>
    tpu.vector_store %arg2[%c0_6, %c256], %13 {strides = array<i32>} : memref<4x512xf32, #tpu.memory_space<vmem>>, vector<4x256xf32>,
    return
  }
  func.func @transform_0(%arg0: i32) -> (i32, i32) {
    %c0_i32 = arith.constant 0 : i32
    %c0_i32_0 = arith.constant 0 : i32
    return %arg0, %c0_i32 : i32, i32
  }
  func.func @transform_1(%arg0: i32) -> (i32, i32) {
    %c0_i32 = arith.constant 0 : i32
    %c0_i32_0 = arith.constant 0 : i32
    return %arg0, %c0_i32 : i32, i32
  }
}

</mosaic_0001>

<llo_original>
// kernel: tpu_custom_call.1
$region0: #{tpu_custom_call.1}
  #allocation0 [shape = 'u32[]', space=smem, size = 0x4, offset = 0x4, fixed_abs, tag = 'smem constant byte address 0x4 - core index']
  #allocation1 [shape = 'u32[144,128]{1,0:T(1,128)}', space=vmem, size = 0x12000, scoped, tag = 'internal scratch']
  %s0 = inlined_call_operand.hbm [shape: f32[4,512], index: 0, kind: input, shape index: {}]
  %s1 = inlined_call_operand.hbm [shape: f32[4,512], index: 1, kind: output, shape index: {}]
  %s2 = sld [smem:[#allocation0]]
  $region18: #{tpu_custom_call.1} parent=0
    _
  %s4 = ssub.s32 1, %s2
  %s5 = scalar_select 0, %s4, %s2
  $region1: #{tpu_custom_call.1} parent=0
    #allocation2 [shape = 'u8[8192]{0}', space=vmem, size = 0x2000, scoped, tag = 'input window, operand 0, single buffered']
    #allocation3 [shape = 's32[1]{0}', space=sflag, size = 0x4, scoped, tag = 'scoped memory for tpu_custom_call.1']
    #allocation4 [shape = 's32[1]{0}', space=sflag, size = 0x4, scoped, tag = 'scoped memory for tpu_custom_call.1']
    #allocation5 [shape = 'u8[8192]{0}', space=vmem, size = 0x2000, scoped, tag = 'output window, operand 0, single buffered']
    %6 = vsyncpa [#allocation3], 0
    %7 = vsyncpa [#allocation4], 0
    // Predicated region
    $region2: #{tpu_custom_call.1} parent=1 // pred_check
      _
    $region3: #{tpu_custom_call.1} parent=1 // pred_check_branch
      %9 = sbr.rel (0) target = $region5
    $region4: #{tpu_custom_call.1} parent=1 // pred_region
      %s11 = ssub.s32 256, 256
      %12 = vsyncadd [#allocation3], %s11
      %s14 = sshll.u32 [#allocation2], 4
      %s15 = int_to_ptr.vmem [resolvable:$true] %s14
      %17 = dma.hbm_to_vmem [thread:$0]  %s0, 256, %s15, [#allocation3]
    $region5: #{tpu_custom_call.1} parent=1 // pred_fallthru
      _
    // Predicated region
    $region6: #{tpu_custom_call.1} parent=1 // pred_check
      _
    $region7: #{tpu_custom_call.1} parent=1 // pred_check_branch
      %19 = sbr.rel (0) target = $region9
    $region8: #{tpu_custom_call.1} parent=1 // pred_region
      %20 = dma.done [#allocation3], 256
    $region9: #{tpu_custom_call.1} parent=1 // pred_fallthru
      _
    %v21 = vld [vmem:[#allocation2] sm:$0xff]
    %v22 = vld [vmem:[#allocation2 + $0x8] sm:$0xff]
    %v23 = vsub.f32 %v21, %v22
    %v24 = vsub.f32 0.0, %v23
    %v25 = vmul.f32 %v24, 1.442695
    %v26 = vpow.pop %v25
    %v27 = vadd.f32 %v26, 1.0
    %v28 = vrcp.pop %v27
    %v29 = vmul.f32 1.0, %v28
    %30 = vst [vmem:[#allocation5] sm:$0xff] %v29
    %v31 = vsub.f32 1.0, %v29
    %32 = vst [vmem:[#allocation5 + $0x8] sm:$0xff] %v31
    // Predicated region
    $region10: #{tpu_custom_call.1} parent=1 // pred_check
      _
    $region11: #{tpu_custom_call.1} parent=1 // pred_check_branch
      %34 = sbr.rel (0) target = $region13
    $region12: #{tpu_custom_call.1} parent=1 // pred_region
      %s36 = ssub.s32 256, 256
      %37 = vsyncadd [#allocation4], %s36
      %s39 = sshll.u32 [#allocation5], 4
      %s40 = int_to_ptr.vmem [resolvable:$true] %s39
      %42 = dma.vmem_to_hbm [thread:$0]  %s40, 256, %s1, [#allocation4]
    $region13: #{tpu_custom_call.1} parent=1 // pred_fallthru
      _
    // Predicated region
    $region14: #{tpu_custom_call.1} parent=1 // pred_check
      _
    $region15: #{tpu_custom_call.1} parent=1 // pred_check_branch
      %44 = sbr.rel (0) target = $region17
    $region16: #{tpu_custom_call.1} parent=1 // pred_region
      %45 = dma.done [#allocation4], 256
    $region17: #{tpu_custom_call.1} parent=1 // pred_fallthru
      _
    %46 = vsyncpa [#allocation3], 1
    %47 = vsyncpa [#allocation4], 1

</llo_original>
